<compile_context>
chip_gen: v7x
topology: tpu7x:2x2x1
jax: 0.10.0
libtpu: 0.0.40
codegen_flags: <defaults>
</compile_context>

<pallas_src>
import jax
import jax.numpy as jnp
from jax.experimental import pallas as pl
from jax.experimental.pallas import tpu as pltpu

LANE = 128      # lane width: hidden-dim alignment
TILE_M = 128    # batch-tile granularity (MXU M)
TB_MAX = 1024   # max batch rows per grid step


def _round_up(n, m):
    return ((n + m - 1) // m) * m


def _pick_batch_tile(b_pad, tb_max):
    """Largest multiple of 128 that divides b_pad (itself a multiple of 128),
    capped at tb_max, preferring >=2 grid steps (v7x: both TensorCores work)."""
    cap = min(tb_max, b_pad)
    cands = [t for t in range(TILE_M, cap + 1, TILE_M) if b_pad % t == 0]
    multi = [t for t in cands if b_pad // t >= 2]
    return max(multi) if multi else max(cands)


def _dqn_kernel(x_ref, w1_ref, b1_ref, w2_ref, b2_ref, w3_ref, b3_ref, o_ref):
    # One batch tile per grid step; all three GEMMs + ReLUs fused.
    # Dots run in the storage dtype (bf16 by default) with f32 accumulation;
    # bias add + ReLU stay in f32 on the VPU (free slots under MXU slack).
    x = x_ref[...]
    h1 = jnp.dot(x, w1_ref[...], preferred_element_type=jnp.float32) + b1_ref[...]
    h1 = jnp.maximum(h1, 0.0).astype(w2_ref.dtype)
    h2 = jnp.dot(h1, w2_ref[...], preferred_element_type=jnp.float32) + b2_ref[...]
    h2 = jnp.maximum(h2, 0.0).astype(w3_ref.dtype)
    out = jnp.dot(h2, w3_ref[...], preferred_element_type=jnp.float32) + b3_ref[...]
    o_ref[...] = out.astype(o_ref.dtype)


def dqn_forward(x, params, *, matmul_dtype=jnp.bfloat16, tb_max=TB_MAX):
    """x: (B, D_in) float32. params: dict from init_dqn_params."""
    p = params["padded"]
    in_size, _, out_size = params["sizes"]
    w1, b1, w2, b2, w3, b3 = (p[k] for k in ("w1", "b1", "w2", "b2", "w3", "b3"))
    d_in, h_pad = w1.shape                 # d_in == in_size (unpadded fan_in)
    assert w3.shape == (h_pad, out_size)   # fan_out unpadded

    B, D_in = x.shape
    assert D_in == in_size == d_in

    # Batch tiling: pad B to a multiple of 128 only (<= 127 wasted rows),
    # then pick the largest divisor tile <= tb_max with >= 2 grid steps when possible.
    b_pad = _round_up(B, TILE_M)
    tb = _pick_batch_tile(b_pad, tb_max)
    grid = (b_pad // tb,)

    # Pad batch dim only; cast matmul operands once in the wrapper.
    x_p = jnp.pad(x, ((0, b_pad - B), (0, 0))).astype(matmul_dtype)
    w1c, w2c, w3c = (w.astype(matmul_dtype) for w in (w1, w2, w3))

    # Advisory cost estimate, matching the trimmed traffic.
    itemsize = jnp.dtype(matmul_dtype).itemsize
    flops = 2 * b_pad * (d_in * h_pad + h_pad * h_pad + h_pad * out_size)
    bytes_accessed = (
        x_p.size * itemsize
        + (w1c.size + w2c.size + w3c.size) * itemsize
        + (b1.size + b2.size + b3.size) * 4
        + b_pad * out_size * 4
    )

    pinned = lambda i: (0, 0)   # constant block -> weights/biases stay resident in VMEM
    out_p = pl.pallas_call(
        _dqn_kernel,
        out_shape=jax.ShapeDtypeStruct((b_pad, out_size), jnp.float32),
        grid=grid,
        in_specs=[
            pl.BlockSpec((tb, d_in), lambda i: (i, 0)),    # x: natural width, K=D_in
            pl.BlockSpec((d_in, h_pad), pinned),           # w1 (fan_in unpadded)
            pl.BlockSpec((1, h_pad), pinned),              # b1
            pl.BlockSpec((h_pad, h_pad), pinned),          # w2
            pl.BlockSpec((1, h_pad), pinned),              # b2
            pl.BlockSpec((h_pad, out_size), pinned),       # w3 (fan_out unpadded)
            pl.BlockSpec((1, out_size), pinned),           # b3
        ],
        out_specs=pl.BlockSpec((tb, out_size), lambda i: (i, 0)),  # narrow writeback
        compiler_params=pltpu.CompilerParams(
            dimension_semantics=("parallel",),             # v7x: shard batch over 2 TCs
        ),
        cost_estimate=pl.CostEstimate(
            flops=flops, transcendentals=0, bytes_accessed=bytes_accessed
        ),
    )(x_p, w1c, b1, w2c, b2, w3c, b3)

    return out_p[:B, :]


def init_dqn_params(key, input_size, output_size, hidden=64):
    """Mimics torch.nn.Linear default init (U(-1/sqrt(fan_in), +1/sqrt(fan_in))).

    Weights are stored transposed as (fan_in, fan_out) so the kernel computes
    y = x @ W + b (== torch's x @ W.T + b).  Only the HIDDEN dimension is
    zero-padded to a 128-aligned width; layer-1 fan_in and layer-3 fan_out keep
    their natural sizes so the x reads and y writes stay narrow.
    """
    keys = jax.random.split(key, 6)

    def linear(kw, kb, fan_in, fan_out):
        bound = 1.0 / jnp.sqrt(jnp.float32(fan_in))
        w = jax.random.uniform(kw, (fan_in, fan_out), jnp.float32, -bound, bound)
        b = jax.random.uniform(kb, (1, fan_out), jnp.float32, -bound, bound)
        return w, b

    w1, b1 = linear(keys[0], keys[1], input_size, hidden)
    w2, b2 = linear(keys[2], keys[3], hidden, hidden)
    w3, b3 = linear(keys[4], keys[5], hidden, output_size)
    raw = {"w1": w1, "b1": b1, "w2": w2, "b2": b2, "w3": w3, "b3": b3}

    h_pad = _round_up(hidden, LANE)

    def pad2(a, rows, cols):
        return jnp.pad(a, ((0, rows - a.shape[0]), (0, cols - a.shape[1])))

    padded = {
        "w1": pad2(w1, input_size, h_pad), "b1": pad2(b1, 1, h_pad),
        "w2": pad2(w2, h_pad, h_pad),      "b2": pad2(b2, 1, h_pad),
        "w3": pad2(w3, h_pad, output_size), "b3": b3,
    }
    # Zero padding of the hidden dim is semantics-preserving: padded hidden
    # units get weight 0 + bias 0 -> ReLU 0 -> multiply zero rows of next W.
    return {"raw": raw, "padded": padded, "sizes": (input_size, hidden, output_size)}


def dqn_reference(x, params):
    """Pure-JAX reference of the PyTorch forward (unpadded weights)."""
    r = params["raw"]
    h1 = jnp.maximum(x @ r["w1"] + r["b1"], 0.0)
    h2 = jnp.maximum(h1 @ r["w2"] + r["b2"], 0.0)
    return h2 @ r["w3"] + r["b3"]


if __name__ == "__main__":
    key = jax.random.PRNGKey(0)
    k_param, k_x = jax.random.split(key)

    batch, input_size, output_size = 2, 16, 8
    params = init_dqn_params(k_param, input_size, output_size)
    x = jax.random.normal(k_x, (batch, input_size), dtype=jnp.float32)

    ref = dqn_reference(x, params)

    # f32 matmul path (exact vs reference)
    out_f32 = jax.block_until_ready(dqn_forward(x, params, matmul_dtype=jnp.float32))
    assert out_f32.shape == (batch, output_size)
    assert jnp.allclose(out_f32, ref, atol=1e-5, rtol=1e-5), "f32 mismatch vs reference"

    # bf16 matmul path (default on all generations: bf16-native MXUs, f32 accumulation)
    out_bf16 = jax.block_until_ready(dqn_forward(x, params))
    assert out_bf16.shape == (batch, output_size)
    assert jnp.allclose(out_bf16, ref, atol=5e-2, rtol=5e-2), "bf16 mismatch vs reference"

    print("KERNEL_OK")
</pallas_src>

<mosaic_0001>
module attributes {stable_mosaic.version = 11 : i64} {
  func.func @_dqn_kernel(%arg0: i32, %arg1: memref<128x16xf32, #tpu.memory_space<vmem>>, %arg2: memref<16x128xf32, #tpu.memory_space<vmem>>, %arg3: memref<1x128xf32, #tpu.memory_space<vmem>>, %arg4: memref<128x128xf32, #tpu.memory_space<vmem>>, %arg5: memref<1x128xf32, #tpu.memory_space<vmem>>, %arg6: memref<128x8xf32, #tpu.memory_space<vmem>>, %arg7: memref<1x8xf32, #tpu.memory_space<vmem>>, %arg8: memref<128x8xf32, #tpu.memory_space<vmem>>) attributes {dimension_semantics = [#tpu.dimension_semantics<parallel>], iteration_bounds = array<i64: 1>, scalar_prefetch = 0 : i64, scratch_operands = 0 : i64, tpu.core_type = #tpu.core_type<tc>, window_params = [{transform_indices = @transform_0, window_bounds = array<i64: 128, 16>}, {pipeline_mode = #tpu.pipeline_mode<synchronous>, transform_indices = @transform_1, window_bounds = array<i64: 16, 128>}, {pipeline_mode = #tpu.pipeline_mode<synchronous>, transform_indices = @transform_2, window_bounds = array<i64: 1, 128>}, {pipeline_mode = #tpu.pipeline_mode<synchronous>, transform_indices = @transform_3, window_bounds = array<i64: 128, 128>}, {pipeline_mode = #tpu.pipeline_mode<synchronous>, transform_indices = @transform_4, window_bounds = array<i64: 1, 128>}, {pipeline_mode = #tpu.pipeline_mode<synchronous>, transform_indices = @transform_5, window_bounds = array<i64: 128, 8>}, {pipeline_mode = #tpu.pipeline_mode<synchronous>, transform_indices = @transform_6, window_bounds = array<i64: 1, 8>}, {transform_indices = @transform_7, window_bounds = array<i64: 128, 8>}]} {
    %c0 = arith.constant 0 : index
    %c0_0 = arith.constant 0 : index
    %0 = vector.load %arg1[%c0, %c0_0] : memref<128x16xf32, #tpu.memory_space<vmem>>, vector<128x16xf32>
    %c0_1 = arith.constant 0 : index
    %c0_2 = arith.constant 0 : index
    %1 = vector.load %arg2[%c0_1, %c0_2] : memref<16x128xf32, #tpu.memory_space<vmem>>, vector<16x128xf32>
    %cst = arith.constant dense<0.000000e+00> : vector<128x128xf32>
    %2 = tpu.matmul %0, %1, %cst {dimension_numbers = #tpu.dot_dimension_numbers<[1], [0], [0], [1], [0, 0, 1, 1], [], []>} : vector<128x16xf32>, vector<16x128xf32>, vector<128x128xf32> -> vector<128x128xf32>
    %c0_3 = arith.constant 0 : index
    %c0_4 = arith.constant 0 : index
    %3 = vector.load %arg3[%c0_3, %c0_4] : memref<1x128xf32, #tpu.memory_space<vmem>>, vector<1x128xf32>
    %4 = vector.broadcast %3 : vector<1x128xf32> to vector<128x128xf32>
    %5 = arith.addf %2, %4 : vector<128x128xf32>
    %cst_5 = arith.constant 0.000000e+00 : f32
    %6 = vector.broadcast %cst_5 : f32 to vector<128x128xf32>
    %7 = arith.maximumf %5, %6 : vector<128x128xf32>
    %c0_6 = arith.constant 0 : index
    %c0_7 = arith.constant 0 : index
    %8 = vector.load %arg4[%c0_6, %c0_7] : memref<128x128xf32, #tpu.memory_space<vmem>>, vector<128x128xf32>
    %cst_8 = arith.constant dense<0.000000e+00> : vector<128x128xf32>
    %9 = tpu.matmul %7, %8, %cst_8 {dimension_numbers = #tpu.dot_dimension_numbers<[1], [0], [0], [1], [0, 0, 1, 1], [], []>} : vector<128x128xf32>, vector<128x128xf32>, vector<128x128xf32> -> vector<128x128xf32>
    %c0_9 = arith.constant 0 : index
    %c0_10 = arith.constant 0 : index
    %10 = vector.load %arg5[%c0_9, %c0_10] : memref<1x128xf32, #tpu.memory_space<vmem>>, vector<1x128xf32>
    %11 = vector.broadcast %10 : vector<1x128xf32> to vector<128x128xf32>
    %12 = arith.addf %9, %11 : vector<128x128xf32>
    %cst_11 = arith.constant 0.000000e+00 : f32
    %13 = vector.broadcast %cst_11 : f32 to vector<128x128xf32>
    %14 = arith.maximumf %12, %13 : vector<128x128xf32>
    %c0_12 = arith.constant 0 : index
    %c0_13 = arith.constant 0 : index
    %15 = vector.load %arg6[%c0_12, %c0_13] : memref<128x8xf32, #tpu.memory_space<vmem>>, vector<128x8xf32>
    %cst_14 = arith.constant dense<0.000000e+00> : vector<128x8xf32>
    %16 = tpu.matmul %14, %15, %cst_14 {dimension_numbers = #tpu.dot_dimension_numbers<[1], [0], [0], [1], [0, 0, 1, 1], [], []>} : vector<128x128xf32>, vector<128x8xf32>, vector<128x8xf32> -> vector<128x8xf32>
    %c0_15 = arith.constant 0 : index
    %c0_16 = arith.constant 0 : index
    %17 = vector.load %arg7[%c0_15, %c0_16] : memref<1x8xf32, #tpu.memory_space<vmem>>, vector<1x8xf32>
    %18 = vector.broadcast %17 : vector<1x8xf32> to vector<128x8xf32>
    %19 = arith.addf %16, %18 : vector<128x8xf32>
    %c0_17 = arith.constant 0 : index
    %c0_18 = arith.constant 0 : index
    %20 = vector.load %arg8[%c0_17, %c0_18] : memref<128x8xf32, #tpu.memory_space<vmem>>, vector<128x8xf32>
    tpu.vector_store %arg8[%c0_17, %c0_18], %19 {strides = array<i32>} : memref<128x8xf32, #tpu.memory_space<vmem>>, vector<128x8xf32>,
    return
  }
  func.func @transform_0(%arg0: i32) -> (i32, i32) {
    %c0_i32 = arith.constant 0 : i32
    %c0_i32_0 = arith.constant 0 : i32
    return %arg0, %c0_i32 : i32, i32
  }
  func.func @transform_1(%arg0: i32) -> (i32, i32) {
    %c0_i32 = arith.constant 0 : i32
    %c0_i32_0 = arith.constant 0 : i32
    %c0_i32_1 = arith.constant 0 : i32
    return %c0_i32, %c0_i32_0 : i32, i32
  }
  func.func @transform_2(%arg0: i32) -> (i32, i32) {
    %c0_i32 = arith.constant 0 : i32
    %c0_i32_0 = arith.constant 0 : i32
    %c0_i32_1 = arith.constant 0 : i32
    return %c0_i32, %c0_i32_0 : i32, i32
  }
  func.func @transform_3(%arg0: i32) -> (i32, i32) {
    %c0_i32 = arith.constant 0 : i32
    %c0_i32_0 = arith.constant 0 : i32
    %c0_i32_1 = arith.constant 0 : i32
    return %c0_i32, %c0_i32_0 : i32, i32
  }
  func.func @transform_4(%arg0: i32) -> (i32, i32) {
    %c0_i32 = arith.constant 0 : i32
    %c0_i32_0 = arith.constant 0 : i32
    %c0_i32_1 = arith.constant 0 : i32
    return %c0_i32, %c0_i32_0 : i32, i32
  }
  func.func @transform_5(%arg0: i32) -> (i32, i32) {
    %c0_i32 = arith.constant 0 : i32
    %c0_i32_0 = arith.constant 0 : i32
    %c0_i32_1 = arith.constant 0 : i32
    return %c0_i32, %c0_i32_0 : i32, i32
  }
  func.func @transform_6(%arg0: i32) -> (i32, i32) {
    %c0_i32 = arith.constant 0 : i32
    %c0_i32_0 = arith.constant 0 : i32
    %c0_i32_1 = arith.constant 0 : i32
    return %c0_i32, %c0_i32_0 : i32, i32
  }
  func.func @transform_7(%arg0: i32) -> (i32, i32) {
    %c0_i32 = arith.constant 0 : i32
    %c0_i32_0 = arith.constant 0 : i32
    return %arg0, %c0_i32 : i32, i32
  }
}

</mosaic_0001>

<llo_original>
// kernel: tpu_custom_call.1
$region0: #{tpu_custom_call.1}
  #allocation0 [shape = 'u32[]', space=smem, size = 0x4, offset = 0x4, fixed_abs, tag = 'smem constant byte address 0x4 - core index']
  #allocation1 [shape = 'u32[144,128]{1,0:T(1,128)}', space=vmem, size = 0x12000, scoped, tag = 'internal scratch']
  %s0 = inlined_call_operand.vmem [shape: f32[128,16], index: 0, kind: input, shape index: {}]
  %s1 = inlined_call_operand.vmem [shape: f32[16,128], index: 1, kind: input, shape index: {}]
  %s2 = inlined_call_operand.vmem [shape: f32[1,128], index: 2, kind: input, shape index: {}]
  %s3 = inlined_call_operand.vmem [shape: f32[128,128], index: 3, kind: input, shape index: {}]
  %s4 = inlined_call_operand.vmem [shape: f32[1,128], index: 4, kind: input, shape index: {}]
  %s5 = inlined_call_operand.vmem [shape: f32[128,8], index: 5, kind: input, shape index: {}]
  %s6 = inlined_call_operand.vmem [shape: f32[1,8], index: 6, kind: input, shape index: {}]
  %s7 = inlined_call_operand.vmem [shape: f32[128,8], index: 7, kind: output, shape index: {}]
  %s8 = sld [smem:[#allocation0]]
  $region38: #{tpu_custom_call.1} parent=0
    _
  %s10 = ssub.s32 1, %s8
  %s11 = scalar_select 0, %s10, %s8
  // Predicated region
  $region2: #{tpu_custom_call.1} parent=0 // pred_check
    _
  $region3: #{tpu_custom_call.1} parent=0 // pred_check_branch
    %13 = sbr.rel (0) target = $region5
  $region4: #{tpu_custom_call.1} parent=0 // pred_region
    _
  $region5: #{tpu_custom_call.1} parent=0 // pred_fallthru
    _
  // Predicated region
  $region6: #{tpu_custom_call.1} parent=0 // pred_check
    _
  $region7: #{tpu_custom_call.1} parent=0 // pred_check_branch
    %15 = sbr.rel (0) target = $region9
  $region8: #{tpu_custom_call.1} parent=0 // pred_region
    _
  $region9: #{tpu_custom_call.1} parent=0 // pred_fallthru
    _
  // Predicated region
  $region10: #{tpu_custom_call.1} parent=0 // pred_check
    _
  $region11: #{tpu_custom_call.1} parent=0 // pred_check_branch
    %17 = sbr.rel (0) target = $region13
  $region12: #{tpu_custom_call.1} parent=0 // pred_region
    _
  $region13: #{tpu_custom_call.1} parent=0 // pred_fallthru
    _
  // Predicated region
  $region14: #{tpu_custom_call.1} parent=0 // pred_check
    _
  $region15: #{tpu_custom_call.1} parent=0 // pred_check_branch
    %19 = sbr.rel (0) target = $region17
  $region16: #{tpu_custom_call.1} parent=0 // pred_region
    _
  $region17: #{tpu_custom_call.1} parent=0 // pred_fallthru
    _
  // Predicated region
  $region18: #{tpu_custom_call.1} parent=0 // pred_check
    _
  $region19: #{tpu_custom_call.1} parent=0 // pred_check_branch
    %21 = sbr.rel (0) target = $region21
  $region20: #{tpu_custom_call.1} parent=0 // pred_region
    _
  $region21: #{tpu_custom_call.1} parent=0 // pred_fallthru
    _
  // Predicated region
  $region22: #{tpu_custom_call.1} parent=0 // pred_check
    _
  $region23: #{tpu_custom_call.1} parent=0 // pred_check_branch
    %23 = sbr.rel (0) target = $region25
  $region24: #{tpu_custom_call.1} parent=0 // pred_region
    _
  $region25: #{tpu_custom_call.1} parent=0 // pred_fallthru
    _
  // Predicated region
  $region26: #{tpu_custom_call.1} parent=0 // pred_check
    _
  $region27: #{tpu_custom_call.1} parent=0 // pred_check_branch
    %25 = sbr.rel (0) target = $region29
  $region28: #{tpu_custom_call.1} parent=0 // pred_region
    _
  $region29: #{tpu_custom_call.1} parent=0 // pred_fallthru
    _
  %v26 = vld [vmem:[%s0] sm:$0xff]
  %v27 = vld [vmem:[%s0 + $0x8] sm:$0xff]
  %v28 = vld [vmem:[%s0 + $0x10] sm:$0xff]
  %v29 = vld [vmem:[%s0 + $0x18] sm:$0xff]
  %v30 = vld [vmem:[%s0 + $0x20] sm:$0xff]
  %v31 = vld [vmem:[%s0 + $0x28] sm:$0xff]
  %v32 = vld [vmem:[%s0 + $0x30] sm:$0xff]
  %v33 = vld [vmem:[%s0 + $0x38] sm:$0xff]
  %v34 = vld [vmem:[%s0 + $0x40] sm:$0xff]
  %v35 = vld [vmem:[%s0 + $0x48] sm:$0xff]
  %v36 = vld [vmem:[%s0 + $0x50] sm:$0xff]
  %v37 = vld [vmem:[%s0 + $0x58] sm:$0xff]
  %v38 = vld [vmem:[%s0 + $0x60] sm:$0xff]
  %v39 = vld [vmem:[%s0 + $0x68] sm:$0xff]
  %v40 = vld [vmem:[%s0 + $0x70] sm:$0xff]
  %v41 = vld [vmem:[%s0 + $0x78] sm:$0xff]
  %v42 = vld [vmem:[%s1] sm:$0xff]
  %v43 = vld [vmem:[%s1 + $0x8] sm:$0xff]
  %v44 = vld [vmem:[%s2] sm:$0x1]
  %v46 = vlaneseq
  %v47 = vshrl.u32 %v46, 7
  %v48 = vsub.s32 0, %v47
  %v49 = vrot.slane %v44, %v48
  %vm51 = vcmask 130048
  %v53 = vsel %vm51, %v26, 0
  %v56 = vsel %vm51, %v27, 0
  %v59 = vsel %vm51, %v28, 0
  %v62 = vsel %vm51, %v29, 0
  %v65 = vsel %vm51, %v30, 0
  %v68 = vsel %vm51, %v31, 0
  %v71 = vsel %vm51, %v32, 0
  %v74 = vsel %vm51, %v33, 0
  %v77 = vsel %vm51, %v34, 0
  %v80 = vsel %vm51, %v35, 0
  %v83 = vsel %vm51, %v36, 0
  %v86 = vsel %vm51, %v37, 0
  %v89 = vsel %vm51, %v38, 0
  %v92 = vsel %vm51, %v39, 0
  %v95 = vsel %vm51, %v40, 0
  %v98 = vsel %vm51, %v41, 0
  %100 = vmatprep.subr.mxu0 0.0
  %101 = vmatpush1.msra.mxu0 %v42
  %102 = vmatprep.subr.mxu0 0.0
  %103 = vmatpush1.msra.mxu0 %v43
  %104 = vmatprep.subr.mxu0 0.0
  %105 = vmatpush1.msra.mxu0 0.0
  %106 = vmatprep.subr.mxu0 0.0
  %107 = vmatpush1.msra.mxu0 0.0
  %108 = vmatprep.subr.mxu0 0.0
  %109 = vmatpush1.msra.mxu0 0.0
  %110 = vmatprep.subr.mxu0 0.0
  %111 = vmatpush1.msra.mxu0 0.0
  %112 = vmatprep.subr.mxu0 0.0
  %113 = vmatpush1.msra.mxu0 0.0
  %114 = vmatprep.subr.mxu0 0.0
  %115 = vmatpush1.msra.mxu0 0.0
  %116 = vmatprep.subr.mxu0 0.0
  %117 = vmatpush1.msra.mxu0 0.0
  %118 = vmatprep.subr.mxu0 0.0
  %119 = vmatpush1.msra.mxu0 0.0
  %120 = vmatprep.subr.mxu0 0.0
  %121 = vmatpush1.msra.mxu0 0.0
  %122 = vmatprep.subr.mxu0 0.0
  %123 = vmatpush1.msra.mxu0 0.0
  %124 = vmatprep.subr.mxu0 0.0
  %125 = vmatpush1.msra.mxu0 0.0
  %126 = vmatprep.subr.mxu0 0.0
  %127 = vmatpush1.msra.mxu0 0.0
  %128 = vmatprep.subr.mxu0 0.0
  %129 = vmatpush1.msra.mxu0 0.0
  %130 = vmatprep.subr.mxu0 0.0
  %131 = vmatpush1.msra.mxu0 0.0
  %132 = vmatprep.subr.mxu0 0.0
  %133 = vmatpush1.msra.mxu0 0.0
  %134 = vmatprep.subr.mxu0 0.0
  %135 = vmatpush1.msra.mxu0 0.0
  %136 = vmatprep.subr.mxu0 0.0
  %137 = vmatpush1.msra.mxu0 0.0
  %138 = vmatprep.subr.mxu0 0.0
  %139 = vmatpush1.msra.mxu0 0.0
  %140 = vmatprep.subr.mxu0 0.0
  %141 = vmatpush1.msra.mxu0 0.0
  %142 = vmatprep.subr.mxu0 0.0
  %143 = vmatpush1.msra.mxu0 0.0
  %144 = vmatprep.subr.mxu0 0.0
  %145 = vmatpush1.msra.mxu0 0.0
  %146 = vmatprep.subr.mxu0 0.0
  %147 = vmatpush1.msra.mxu0 0.0
  %148 = vmatprep.subr.mxu0 0.0
  %149 = vmatpush1.msra.mxu0 0.0
  %150 = vmatprep.subr.mxu0 0.0
  %151 = vmatpush1.msra.mxu0 0.0
  %152 = vmatprep.subr.mxu0 0.0
  %153 = vmatpush1.msra.mxu0 0.0
  %154 = vmatprep.subr.mxu0 0.0
  %155 = vmatpush1.msra.mxu0 0.0
  %156 = vmatprep.subr.mxu0 0.0
  %157 = vmatpush1.msra.mxu0 0.0
  %158 = vmatprep.subr.mxu0 0.0
  %159 = vmatpush1.msra.mxu0 0.0
  %160 = vmatprep.subr.mxu0 0.0
  %161 = vmatpush1.msra.mxu0 0.0
  %162 = vmatprep.subr.mxu0 0.0
  %163 = vmatpush1.msra.mxu0 0.0
  %164 = vmatprep.mubr.f32.mxu0 0.0
  %165 = vmatmul.mubr.f32.gmra.mrb[0].mxu0 %v53
  %v166 = vpop.f32.mrb[0].mxu0
  %v167 = vadd.f32 %v49, %v166
  %v168 = vpop.f32.mrb[0].mxu0
  %169 = vmatprep.mubr.f32.mxu0 0.0
  %170 = vmatmul.mubr.f32.gmra.mrb[0].mxu0 %v56
  %v171 = vpop.f32.mrb[0].mxu0
  %v172 = vadd.f32 %v49, %v171
  %v173 = vpop.f32.mrb[0].mxu0
  %174 = vmatprep.mubr.f32.mxu0 0.0
  %175 = vmatmul.mubr.f32.gmra.mrb[0].mxu0 %v59
  %v176 = vpop.f32.mrb[0].mxu0
  %v177 = vadd.f32 %v49, %v176
  %v178 = vpop.f32.mrb[0].mxu0
  %179 = vmatprep.mubr.f32.mxu0 0.0
  %180 = vmatmul.mubr.f32.gmra.mrb[0].mxu0 %v62
  %v181 = vpop.f32.mrb[0].mxu0
  %v182 = vadd.f32 %v49, %v181
  %v183 = vpop.f32.mrb[0].mxu0
  %184 = vmatprep.mubr.f32.mxu0 0.0
  %185 = vmatmul.mubr.f32.gmra.mrb[0].mxu0 %v65
  %v186 = vpop.f32.mrb[0].mxu0
  %v187 = vadd.f32 %v49, %v186
  %v188 = vpop.f32.mrb[0].mxu0
  %189 = vmatprep.mubr.f32.mxu0 0.0
  %190 = vmatmul.mubr.f32.gmra.mrb[0].mxu0 %v68
  %v191 = vpop.f32.mrb[0].mxu0
  %v192 = vadd.f32 %v49, %v191
  %v193 = vpop.f32.mrb[0].mxu0
  %194 = vmatprep.mubr.f32.mxu0 0.0
  %195 = vmatmul.mubr.f32.gmra.mrb[0].mxu0 %v71
  %v196 = vpop.f32.mrb[0].mxu0
  %v197 = vadd.f32 %v49, %v196
  %v198 = vpop.f32.mrb[0].mxu0
  %199 = vmatprep.mubr.f32.mxu0 0.0
  %200 = vmatmul.mubr.f32.gmra.mrb[0].mxu0 %v74
  %v201 = vpop.f32.mrb[0].mxu0
  %v202 = vadd.f32 %v49, %v201
  %v203 = vpop.f32.mrb[0].mxu0
  %204 = vmatprep.mubr.f32.mxu0 0.0
  %205 = vmatmul.mubr.f32.gmra.mrb[0].mxu0 %v77
  %v206 = vpop.f32.mrb[0].mxu0
  %v207 = vadd.f32 %v49, %v206
  %v208 = vpop.f32.mrb[0].mxu0
  %209 = vmatprep.mubr.f32.mxu0 0.0
  %210 = vmatmul.mubr.f32.gmra.mrb[0].mxu0 %v80
  %v211 = vpop.f32.mrb[0].mxu0
  %v212 = vadd.f32 %v49, %v211
  %v213 = vpop.f32.mrb[0].mxu0
  %214 = vmatprep.mubr.f32.mxu0 0.0
  %215 = vmatmul.mubr.f32.gmra.mrb[0].mxu0 %v83
  %v216 = vpop.f32.mrb[0].mxu0
  %v217 = vadd.f32 %v49, %v216
  %v218 = vpop.f32.mrb[0].mxu0
  %219 = vmatprep.mubr.f32.mxu0 0.0
  %220 = vmatmul.mubr.f32.gmra.mrb[0].mxu0 %v86
  %v221 = vpop.f32.mrb[0].mxu0
  %v222 = vadd.f32 %v49, %v221
  %v223 = vpop.f32.mrb[0].mxu0
  %224 = vmatprep.mubr.f32.mxu0 0.0
  %225 = vmatmul.mubr.f32.gmra.mrb[0].mxu0 %v89
  %v226 = vpop.f32.mrb[0].mxu0
  %v227 = vadd.f32 %v49, %v226
  %v228 = vpop.f32.mrb[0].mxu0
  %229 = vmatprep.mubr.f32.mxu0 0.0
  %230 = vmatmul.mubr.f32.gmra.mrb[0].mxu0 %v92
  %v231 = vpop.f32.mrb[0].mxu0
  %v232 = vadd.f32 %v49, %v231
  %v233 = vpop.f32.mrb[0].mxu0
  %234 = vmatprep.mubr.f32.mxu0 0.0
  %235 = vmatmul.mubr.f32.gmra.mrb[0].mxu0 %v95
  %v236 = vpop.f32.mrb[0].mxu0
  %v237 = vadd.f32 %v49, %v236
  %v238 = vpop.f32.mrb[0].mxu0
  %239 = vmatprep.mubr.f32.mxu0 0.0
  %240 = vmatmul.mubr.f32.gmra.mrb[0].mxu0 %v98
  %v241 = vpop.f32.mrb[0].mxu0
  %v242 = vadd.f32 %v49, %v241
  %v243 = vpop.f32.mrb[0].mxu0
  %244 = vdwg.mxu0
  %v245 = vmax.f32 %v167, 0.0
  %v246 = vmax.f32 %v172, 0.0
  %v247 = vmax.f32 %v177, 0.0
  %v248 = vmax.f32 %v182, 0.0
  %v249 = vmax.f32 %v187, 0.0
  %v250 = vmax.f32 %v192, 0.0
  %v251 = vmax.f32 %v197, 0.0
  %v252 = vmax.f32 %v202, 0.0
  %v253 = vmax.f32 %v207, 0.0
  %v254 = vmax.f32 %v212, 0.0
  %v255 = vmax.f32 %v217, 0.0
  %v256 = vmax.f32 %v222, 0.0
  %v257 = vmax.f32 %v227, 0.0
  %v258 = vmax.f32 %v232, 0.0
  %v259 = vmax.f32 %v237, 0.0
  %v260 = vmax.f32 %v242, 0.0
  %v261 = vld [vmem:[%s3] sm:$0xff]
  %v262 = vld [vmem:[%s3 + $0x8] sm:$0xff]
  %v263 = vld [vmem:[%s3 + $0x10] sm:$0xff]
  %v264 = vld [vmem:[%s3 + $0x18] sm:$0xff]
  %v265 = vld [vmem:[%s3 + $0x20] sm:$0xff]
  %v266 = vld [vmem:[%s3 + $0x28] sm:$0xff]
  %v267 = vld [vmem:[%s3 + $0x30] sm:$0xff]
  %v268 = vld [vmem:[%s3 + $0x38] sm:$0xff]
  %v269 = vld [vmem:[%s3 + $0x40] sm:$0xff]
  %v270 = vld [vmem:[%s3 + $0x48] sm:$0xff]
  %v271 = vld [vmem:[%s3 + $0x50] sm:$0xff]
  %v272 = vld [vmem:[%s3 + $0x58] sm:$0xff]
  %v273 = vld [vmem:[%s3 + $0x60] sm:$0xff]
  %v274 = vld [vmem:[%s3 + $0x68] sm:$0xff]
  %v275 = vld [vmem:[%s3 + $0x70] sm:$0xff]
  %v276 = vld [vmem:[%s3 + $0x78] sm:$0xff]
  %v277 = vld [vmem:[%s4] sm:$0x1]
  %v279 = vlaneseq
  %v280 = vshrl.u32 %v279, 7
  %v281 = vsub.s32 0, %v280
  %v282 = vrot.slane %v277, %v281
  %284 = vmatprep.subr.mxu0 0.0
  %285 = vmatpush1.msra.mxu0 %v261
  %286 = vmatprep.subr.mxu0 0.0
  %287 = vmatpush1.msra.mxu0 %v262
  %288 = vmatprep.subr.mxu0 0.0
  %289 = vmatpush1.msra.mxu0 %v263
  %290 = vmatprep.subr.mxu0 0.0
  %291 = vmatpush1.msra.mxu0 %v264
  %292 = vmatprep.subr.mxu0 0.0
  %293 = vmatpush1.msra.mxu0 %v265
  %294 = vmatprep.subr.mxu0 0.0
  %295 = vmatpush1.msra.mxu0 %v266
  %296 = vmatprep.subr.mxu0 0.0
  %297 = vmatpush1.msra.mxu0 %v267
  %298 = vmatprep.subr.mxu0 0.0
  %299 = vmatpush1.msra.mxu0 %v268
  %300 = vmatprep.subr.mxu0 0.0
  %301 = vmatpush1.msra.mxu0 %v269
  %302 = vmatprep.subr.mxu0 0.0
  %303 = vmatpush1.msra.mxu0 %v270
  %304 = vmatprep.subr.mxu0 0.0
  %305 = vmatpush1.msra.mxu0 %v271
  %306 = vmatprep.subr.mxu0 0.0
  %307 = vmatpush1.msra.mxu0 %v272
  %308 = vmatprep.subr.mxu0 0.0
  %309 = vmatpush1.msra.mxu0 %v273
  %310 = vmatprep.subr.mxu0 0.0
  %311 = vmatpush1.msra.mxu0 %v274
  %312 = vmatprep.subr.mxu0 0.0
  %313 = vmatpush1.msra.mxu0 %v275
  %314 = vmatprep.subr.mxu0 0.0
  %315 = vmatpush1.msra.mxu0 %v276
  %316 = vmatprep.subr.mxu0 0.0
  %317 = vmatpush1.msra.mxu0 0.0
  %318 = vmatprep.subr.mxu0 0.0
  %319 = vmatpush1.msra.mxu0 0.0
  %320 = vmatprep.subr.mxu0 0.0
  %321 = vmatpush1.msra.mxu0 0.0
  %322 = vmatprep.subr.mxu0 0.0
  %323 = vmatpush1.msra.mxu0 0.0
  %324 = vmatprep.subr.mxu0 0.0
  %325 = vmatpush1.msra.mxu0 0.0
  %326 = vmatprep.subr.mxu0 0.0
  %327 = vmatpush1.msra.mxu0 0.0
  %328 = vmatprep.subr.mxu0 0.0
  %329 = vmatpush1.msra.mxu0 0.0
  %330 = vmatprep.subr.mxu0 0.0
  %331 = vmatpush1.msra.mxu0 0.0
  %332 = vmatprep.subr.mxu0 0.0
  %333 = vmatpush1.msra.mxu0 0.0
  %334 = vmatprep.subr.mxu0 0.0
  %335 = vmatpush1.msra.mxu0 0.0
  %336 = vmatprep.subr.mxu0 0.0
  %337 = vmatpush1.msra.mxu0 0.0
  %338 = vmatprep.subr.mxu0 0.0
  %339 = vmatpush1.msra.mxu0 0.0
  %340 = vmatprep.subr.mxu0 0.0
  %341 = vmatpush1.msra.mxu0 0.0
  %342 = vmatprep.subr.mxu0 0.0
  %343 = vmatpush1.msra.mxu0 0.0
  %344 = vmatprep.subr.mxu0 0.0
  %345 = vmatpush1.msra.mxu0 0.0
  %346 = vmatprep.subr.mxu0 0.0
  %347 = vmatpush1.msra.mxu0 0.0
  %348 = vmatprep.mubr.f32.mxu0 0.0
  %349 = vmatmul.mubr.f32.gmra.mrb[0].mxu0 %v245
  %v350 = vpop.f32.mrb[0].mxu0
  %v351 = vadd.f32 %v282, %v350
  %v352 = vpop.f32.mrb[0].mxu0
  %353 = vmatprep.mubr.f32.mxu0 0.0
  %354 = vmatmul.mubr.f32.gmra.mrb[0].mxu0 %v246
  %v355 = vpop.f32.mrb[0].mxu0
  %v356 = vadd.f32 %v282, %v355
  %v357 = vpop.f32.mrb[0].mxu0
  %358 = vmatprep.mubr.f32.mxu0 0.0
  %359 = vmatmul.mubr.f32.gmra.mrb[0].mxu0 %v247
  %v360 = vpop.f32.mrb[0].mxu0
  %v361 = vadd.f32 %v282, %v360
  %v362 = vpop.f32.mrb[0].mxu0
  %363 = vmatprep.mubr.f32.mxu0 0.0
  %364 = vmatmul.mubr.f32.gmra.mrb[0].mxu0 %v248
  %v365 = vpop.f32.mrb[0].mxu0
  %v366 = vadd.f32 %v282, %v365
  %v367 = vpop.f32.mrb[0].mxu0
  %368 = vmatprep.mubr.f32.mxu0 0.0
  %369 = vmatmul.mubr.f32.gmra.mrb[0].mxu0 %v249
  %v370 = vpop.f32.mrb[0].mxu0
  %v371 = vadd.f32 %v282, %v370
  %v372 = vpop.f32.mrb[0].mxu0
  %373 = vmatprep.mubr.f32.mxu0 0.0
  %374 = vmatmul.mubr.f32.gmra.mrb[0].mxu0 %v250
  %v375 = vpop.f32.mrb[0].mxu0
  %v376 = vadd.f32 %v282, %v375
  %v377 = vpop.f32.mrb[0].mxu0
  %378 = vmatprep.mubr.f32.mxu0 0.0
  %379 = vmatmul.mubr.f32.gmra.mrb[0].mxu0 %v251
  %v380 = vpop.f32.mrb[0].mxu0
  %v381 = vadd.f32 %v282, %v380
  %v382 = vpop.f32.mrb[0].mxu0
  %383 = vmatprep.mubr.f32.mxu0 0.0
  %384 = vmatmul.mubr.f32.gmra.mrb[0].mxu0 %v252
  %v385 = vpop.f32.mrb[0].mxu0
  %v386 = vadd.f32 %v282, %v385
  %v387 = vpop.f32.mrb[0].mxu0
  %388 = vmatprep.mubr.f32.mxu0 0.0
  %389 = vmatmul.mubr.f32.gmra.mrb[0].mxu0 %v253
  %v390 = vpop.f32.mrb[0].mxu0
  %v391 = vadd.f32 %v282, %v390
  %v392 = vpop.f32.mrb[0].mxu0
  %393 = vmatprep.mubr.f32.mxu0 0.0
  %394 = vmatmul.mubr.f32.gmra.mrb[0].mxu0 %v254
  %v395 = vpop.f32.mrb[0].mxu0
  %v396 = vadd.f32 %v282, %v395
  %v397 = vpop.f32.mrb[0].mxu0
  %398 = vmatprep.mubr.f32.mxu0 0.0
  %399 = vmatmul.mubr.f32.gmra.mrb[0].mxu0 %v255
  %v400 = vpop.f32.mrb[0].mxu0
  %v401 = vadd.f32 %v282, %v400
  %v402 = vpop.f32.mrb[0].mxu0
  %403 = vmatprep.mubr.f32.mxu0 0.0
  %404 = vmatmul.mubr.f32.gmra.mrb[0].mxu0 %v256
  %v405 = vpop.f32.mrb[0].mxu0
  %v406 = vadd.f32 %v282, %v405
  %v407 = vpop.f32.mrb[0].mxu0
  %408 = vmatprep.mubr.f32.mxu0 0.0
  %409 = vmatmul.mubr.f32.gmra.mrb[0].mxu0 %v257
  %v410 = vpop.f32.mrb[0].mxu0
  %v411 = vadd.f32 %v282, %v410
  %v412 = vpop.f32.mrb[0].mxu0
  %413 = vmatprep.mubr.f32.mxu0 0.0
  %414 = vmatmul.mubr.f32.gmra.mrb[0].mxu0 %v258
  %v415 = vpop.f32.mrb[0].mxu0
  %v416 = vadd.f32 %v282, %v415
  %v417 = vpop.f32.mrb[0].mxu0
  %418 = vmatprep.mubr.f32.mxu0 0.0
  %419 = vmatmul.mubr.f32.gmra.mrb[0].mxu0 %v259
  %v420 = vpop.f32.mrb[0].mxu0
  %v421 = vadd.f32 %v282, %v420
  %v422 = vpop.f32.mrb[0].mxu0
  %423 = vmatprep.mubr.f32.mxu0 0.0
  %424 = vmatmul.mubr.f32.gmra.mrb[0].mxu0 %v260
  %v425 = vpop.f32.mrb[0].mxu0
  %v426 = vadd.f32 %v282, %v425
  %v427 = vpop.f32.mrb[0].mxu0
  %428 = vdwg.mxu0
  %v429 = vmax.f32 %v351, 0.0
  %v430 = vmax.f32 %v356, 0.0
  %v431 = vmax.f32 %v361, 0.0
  %v432 = vmax.f32 %v366, 0.0
  %v433 = vmax.f32 %v371, 0.0
  %v434 = vmax.f32 %v376, 0.0
  %v435 = vmax.f32 %v381, 0.0
  %v436 = vmax.f32 %v386, 0.0
  %v437 = vmax.f32 %v391, 0.0
  %v438 = vmax.f32 %v396, 0.0
  %v439 = vmax.f32 %v401, 0.0
  %v440 = vmax.f32 %v406, 0.0
  %v441 = vmax.f32 %v411, 0.0
  %v442 = vmax.f32 %v416, 0.0
  %v443 = vmax.f32 %v421, 0.0
  %v444 = vmax.f32 %v426, 0.0
  %v445 = vld [vmem:[%s5] sm:$0xff]
  %v446 = vld [vmem:[%s5 + $0x8] sm:$0xff]
  %v447 = vld [vmem:[%s5 + $0x10] sm:$0xff]
  %v448 = vld [vmem:[%s5 + $0x18] sm:$0xff]
  %v449 = vld [vmem:[%s5 + $0x20] sm:$0xff]
  %v450 = vld [vmem:[%s5 + $0x28] sm:$0xff]
  %v451 = vld [vmem:[%s5 + $0x30] sm:$0xff]
  %v452 = vld [vmem:[%s5 + $0x38] sm:$0xff]
  %v453 = vld [vmem:[%s5 + $0x40] sm:$0xff]
  %v454 = vld [vmem:[%s5 + $0x48] sm:$0xff]
  %v455 = vld [vmem:[%s5 + $0x50] sm:$0xff]
  %v456 = vld [vmem:[%s5 + $0x58] sm:$0xff]
  %v457 = vld [vmem:[%s5 + $0x60] sm:$0xff]
  %v458 = vld [vmem:[%s5 + $0x68] sm:$0xff]
  %v459 = vld [vmem:[%s5 + $0x70] sm:$0xff]
  %v460 = vld [vmem:[%s5 + $0x78] sm:$0xff]
  %v461 = vld [vmem:[%s6] sm:$0x1]
  %v463 = vlaneseq
  %v464 = vshrl.u32 %v463, 7
  %v465 = vsub.s32 0, %v464
  %v466 = vrot.slane %v461, %v465
  %468 = vmatprep.subr.mxu0 0.0
  %469 = vmatpush1.msra.mxu0 %v445
  %470 = vmatprep.subr.mxu0 0.0
  %471 = vmatpush1.msra.mxu0 %v446
  %472 = vmatprep.subr.mxu0 0.0
  %473 = vmatpush1.msra.mxu0 %v447
  %474 = vmatprep.subr.mxu0 0.0
  %475 = vmatpush1.msra.mxu0 %v448
  %476 = vmatprep.subr.mxu0 0.0
  %477 = vmatpush1.msra.mxu0 %v449
  %478 = vmatprep.subr.mxu0 0.0
  %479 = vmatpush1.msra.mxu0 %v450
  %480 = vmatprep.subr.mxu0 0.0
  %481 = vmatpush1.msra.mxu0 %v451
  %482 = vmatprep.subr.mxu0 0.0
  %483 = vmatpush1.msra.mxu0 %v452
  %484 = vmatprep.subr.mxu0 0.0
  %485 = vmatpush1.msra.mxu0 %v453
  %486 = vmatprep.subr.mxu0 0.0
  %487 = vmatpush1.msra.mxu0 %v454
  %488 = vmatprep.subr.mxu0 0.0
  %489 = vmatpush1.msra.mxu0 %v455
  %490 = vmatprep.subr.mxu0 0.0
  %491 = vmatpush1.msra.mxu0 %v456
  %492 = vmatprep.subr.mxu0 0.0
  %493 = vmatpush1.msra.mxu0 %v457
  %494 = vmatprep.subr.mxu0 0.0
  %495 = vmatpush1.msra.mxu0 %v458
  %496 = vmatprep.subr.mxu0 0.0
  %497 = vmatpush1.msra.mxu0 %v459
  %498 = vmatprep.subr.mxu0 0.0
  %499 = vmatpush1.msra.mxu0 %v460
  %500 = vmatprep.subr.mxu0 0.0
  %501 = vmatpush1.msra.mxu0 0.0
  %502 = vmatprep.subr.mxu0 0.0
  %503 = vmatpush1.msra.mxu0 0.0
  %504 = vmatprep.subr.mxu0 0.0
  %505 = vmatpush1.msra.mxu0 0.0
  %506 = vmatprep.subr.mxu0 0.0
  %507 = vmatpush1.msra.mxu0 0.0
  %508 = vmatprep.subr.mxu0 0.0
  %509 = vmatpush1.msra.mxu0 0.0
  %510 = vmatprep.subr.mxu0 0.0
  %511 = vmatpush1.msra.mxu0 0.0
  %512 = vmatprep.subr.mxu0 0.0
  %513 = vmatpush1.msra.mxu0 0.0
  %514 = vmatprep.subr.mxu0 0.0
  %515 = vmatpush1.msra.mxu0 0.0
  %516 = vmatprep.subr.mxu0 0.0
  %517 = vmatpush1.msra.mxu0 0.0
  %518 = vmatprep.subr.mxu0 0.0
  %519 = vmatpush1.msra.mxu0 0.0
  %520 = vmatprep.subr.mxu0 0.0
  %521 = vmatpush1.msra.mxu0 0.0
  %522 = vmatprep.subr.mxu0 0.0
  %523 = vmatpush1.msra.mxu0 0.0
  %524 = vmatprep.subr.mxu0 0.0
  %525 = vmatpush1.msra.mxu0 0.0
  %526 = vmatprep.subr.mxu0 0.0
  %527 = vmatpush1.msra.mxu0 0.0
  %528 = vmatprep.subr.mxu0 0.0
  %529 = vmatpush1.msra.mxu0 0.0
  %530 = vmatprep.subr.mxu0 0.0
  %531 = vmatpush1.msra.mxu0 0.0
  %532 = vmatprep.mubr.f32.mxu0 0.0
  %533 = vmatmul.mubr.f32.gmra.mrb[0].mxu0 %v429
  %v534 = vpop.f32.mrb[0].mxu0
  %v535 = vadd.f32 %v466, %v534
  %v536 = vpop.f32.mrb[0].mxu0
  %537 = vmatprep.mubr.f32.mxu0 0.0
  %538 = vmatmul.mubr.f32.gmra.mrb[0].mxu0 %v430
  %v539 = vpop.f32.mrb[0].mxu0
  %v540 = vadd.f32 %v466, %v539
  %v541 = vpop.f32.mrb[0].mxu0
  %542 = vmatprep.mubr.f32.mxu0 0.0
  %543 = vmatmul.mubr.f32.gmra.mrb[0].mxu0 %v431
  %v544 = vpop.f32.mrb[0].mxu0
  %v545 = vadd.f32 %v466, %v544
  %v546 = vpop.f32.mrb[0].mxu0
  %547 = vmatprep.mubr.f32.mxu0 0.0
  %548 = vmatmul.mubr.f32.gmra.mrb[0].mxu0 %v432
  %v549 = vpop.f32.mrb[0].mxu0
  %v550 = vadd.f32 %v466, %v549
  %v551 = vpop.f32.mrb[0].mxu0
  %552 = vmatprep.mubr.f32.mxu0 0.0
  %553 = vmatmul.mubr.f32.gmra.mrb[0].mxu0 %v433
  %v554 = vpop.f32.mrb[0].mxu0
  %v555 = vadd.f32 %v466, %v554
  %v556 = vpop.f32.mrb[0].mxu0
  %557 = vmatprep.mubr.f32.mxu0 0.0
  %558 = vmatmul.mubr.f32.gmra.mrb[0].mxu0 %v434
  %v559 = vpop.f32.mrb[0].mxu0
  %v560 = vadd.f32 %v466, %v559
  %v561 = vpop.f32.mrb[0].mxu0
  %562 = vmatprep.mubr.f32.mxu0 0.0
  %563 = vmatmul.mubr.f32.gmra.mrb[0].mxu0 %v435
  %v564 = vpop.f32.mrb[0].mxu0
  %v565 = vadd.f32 %v466, %v564
  %v566 = vpop.f32.mrb[0].mxu0
  %567 = vmatprep.mubr.f32.mxu0 0.0
  %568 = vmatmul.mubr.f32.gmra.mrb[0].mxu0 %v436
  %v569 = vpop.f32.mrb[0].mxu0
  %v570 = vadd.f32 %v466, %v569
  %v571 = vpop.f32.mrb[0].mxu0
  %572 = vmatprep.mubr.f32.mxu0 0.0
  %573 = vmatmul.mubr.f32.gmra.mrb[0].mxu0 %v437
  %v574 = vpop.f32.mrb[0].mxu0
  %v575 = vadd.f32 %v466, %v574
  %v576 = vpop.f32.mrb[0].mxu0
  %577 = vmatprep.mubr.f32.mxu0 0.0
  %578 = vmatmul.mubr.f32.gmra.mrb[0].mxu0 %v438
  %v579 = vpop.f32.mrb[0].mxu0
  %v580 = vadd.f32 %v466, %v579
  %v581 = vpop.f32.mrb[0].mxu0
  %582 = vmatprep.mubr.f32.mxu0 0.0
  %583 = vmatmul.mubr.f32.gmra.mrb[0].mxu0 %v439
  %v584 = vpop.f32.mrb[0].mxu0
  %v585 = vadd.f32 %v466, %v584
  %v586 = vpop.f32.mrb[0].mxu0
  %587 = vmatprep.mubr.f32.mxu0 0.0
  %588 = vmatmul.mubr.f32.gmra.mrb[0].mxu0 %v440
  %v589 = vpop.f32.mrb[0].mxu0
  %v590 = vadd.f32 %v466, %v589
  %v591 = vpop.f32.mrb[0].mxu0
  %592 = vmatprep.mubr.f32.mxu0 0.0
  %593 = vmatmul.mubr.f32.gmra.mrb[0].mxu0 %v441
  %v594 = vpop.f32.mrb[0].mxu0
  %v595 = vadd.f32 %v466, %v594
  %v596 = vpop.f32.mrb[0].mxu0
  %597 = vmatprep.mubr.f32.mxu0 0.0
  %598 = vmatmul.mubr.f32.gmra.mrb[0].mxu0 %v442
  %v599 = vpop.f32.mrb[0].mxu0
  %v600 = vadd.f32 %v466, %v599
  %v601 = vpop.f32.mrb[0].mxu0
  %602 = vmatprep.mubr.f32.mxu0 0.0
  %603 = vmatmul.mubr.f32.gmra.mrb[0].mxu0 %v443
  %v604 = vpop.f32.mrb[0].mxu0
  %v605 = vadd.f32 %v466, %v604
  %v606 = vpop.f32.mrb[0].mxu0
  %607 = vmatprep.mubr.f32.mxu0 0.0
  %608 = vmatmul.mubr.f32.gmra.mrb[0].mxu0 %v444
  %v609 = vpop.f32.mrb[0].mxu0
  %v610 = vadd.f32 %v466, %v609
  %v611 = vpop.f32.mrb[0].mxu0
  %612 = vdwg.mxu0
  %vm613 = vcmask 64512
  %614 = vst.msk [vmem:[%s7] sm:$0xff] %vm613, %v535
  %615 = vst.msk [vmem:[%s7 + $0x8] sm:$0xff] %vm613, %v540
  %616 = vst.msk [vmem:[%s7 + $0x10] sm:$0xff] %vm613, %v545
  %617 = vst.msk [vmem:[%s7 + $0x18] sm:$0xff] %vm613, %v550
  %618 = vst.msk [vmem:[%s7 + $0x20] sm:$0xff] %vm613, %v555
  %619 = vst.msk [vmem:[%s7 + $0x28] sm:$0xff] %vm613, %v560
  %620 = vst.msk [vmem:[%s7 + $0x30] sm:$0xff] %vm613, %v565
  %621 = vst.msk [vmem:[%s7 + $0x38] sm:$0xff] %vm613, %v570
  %622 = vst.msk [vmem:[%s7 + $0x40] sm:$0xff] %vm613, %v575
  %623 = vst.msk [vmem:[%s7 + $0x48] sm:$0xff] %vm613, %v580
  %624 = vst.msk [vmem:[%s7 + $0x50] sm:$0xff] %vm613, %v585
  %625 = vst.msk [vmem:[%s7 + $0x58] sm:$0xff] %vm613, %v590
  %626 = vst.msk [vmem:[%s7 + $0x60] sm:$0xff] %vm613, %v595
  %627 = vst.msk [vmem:[%s7 + $0x68] sm:$0xff] %vm613, %v600
  %628 = vst.msk [vmem:[%s7 + $0x70] sm:$0xff] %vm613, %v605
  %629 = vst.msk [vmem:[%s7 + $0x78] sm:$0xff] %vm613, %v610
  // Predicated region
  $region30: #{tpu_custom_call.1} parent=0 // pred_check
    _
  $region31: #{tpu_custom_call.1} parent=0 // pred_check_branch
    %631 = sbr.rel (0) target = $region33
  $region32: #{tpu_custom_call.1} parent=0 // pred_region
    _
  $region33: #{tpu_custom_call.1} parent=0 // pred_fallthru
    _
  // Predicated region
  $region34: #{tpu_custom_call.1} parent=0 // pred_check
    _
  $region35: #{tpu_custom_call.1} parent=0 // pred_check_branch
    %633 = sbr.rel (0) target = $region37
  $region36: #{tpu_custom_call.1} parent=0 // pred_region
    _
  $region37: #{tpu_custom_call.1} parent=0 // pred_fallthru
    _

</llo_original>
